<compile_context>
chip_gen: v7x
topology: tpu7x:2x2x1
jax: 0.10.0
libtpu: 0.0.40
codegen_flags: <defaults>
</compile_context>

<pallas_src>
import functools
from collections import namedtuple

import jax
import jax.numpy as jnp
from jax import lax
from jax.experimental import pallas as pl
from jax.experimental.pallas import tpu as pltpu


def _round_up(x, m):
    return (x + m - 1) // m * m


# ---------------------------------------------------------------------------
# pltpu.roll direction probe (resolved once, outside any jit trace)
# ---------------------------------------------------------------------------
_ROLL_IS_JNP_CONVENTION = None


def _full_spec(shape):
    nd = len(shape)
    return pl.BlockSpec(shape, lambda i, _nd=nd: (0,) * _nd)


def _ensure_roll_convention():
    """Determine whether pltpu.roll follows jnp.roll's convention."""
    # TODO(synk): could be hard-coded per jax release; the one-off probe keeps
    # tap offsets correct under either rotate direction.
    global _ROLL_IS_JNP_CONVENTION
    if _ROLL_IS_JNP_CONVENTION is not None:
        return

    def k(x_ref, o_ref):
        o_ref[...] = pltpu.roll(x_ref[...], 1, axis=1)

    x = lax.broadcasted_iota(jnp.float32, (8, 128), 1)
    out = pl.pallas_call(
        k,
        out_shape=jax.ShapeDtypeStruct((8, 128), jnp.float32),
        grid=(1,),
        in_specs=[_full_spec((8, 128))],
        out_specs=_full_spec((8, 128)),
    )(x)
    v = int(out[0, 0])
    if v == 127:
        _ROLL_IS_JNP_CONVENTION = True     # out[j] = in[(j - shift) % n]
    elif v == 1:
        _ROLL_IS_JNP_CONVENTION = False    # out[j] = in[(j + shift) % n]
    else:
        raise RuntimeError("unexpected pltpu.roll semantics")


def _shift_for_offset(off, n):
    """Roll amount so that rolled[:, q] == x[:, q + off]."""
    assert _ROLL_IS_JNP_CONVENTION is not None
    return (-off) % n if _ROLL_IS_JNP_CONVENTION else off % n


# ---------------------------------------------------------------------------
# Fused "chain of tap-convolutions" Pallas kernel
# ---------------------------------------------------------------------------
LayerSpec = namedtuple(
    "LayerSpec",
    "src offsets cout path act residual_src mask "
    "scale_off shift_off ps_off psh_off")


def _stage_kernel(*refs, layers, has_mask):
    """refs = [x, (mask), affine_pack, w_0..w_{L-1}, out].

    Per layer: y = conv(vals[src]) as a single merged-tap MXU matmul (or a
    per-tap MXU / f32-VPU fallback for tiny Cin), then per-channel affine,
    activation, optional masked residual add, optional post-affine, optional
    halo re-mask.  All intermediates stay in VMEM/vregs; epilogue math is f32.
    """
    out_ref = refs[-1]
    idx = 0
    x = refs[idx][...].astype(jnp.float32)
    idx += 1
    if has_mask:
        mask = refs[idx][...]
        idx += 1
    else:
        mask = None
    aff_ref = refs[idx]
    idx += 1
    w_refs = refs[idx:-1]
    p_lanes = x.shape[1]
    vals = [x]

    def aff(off, c):
        return aff_ref[off:off + c, :]                 # (c, 1) f32

    def shifted(a, off):
        if off == 0:
            return a
        return pltpu.roll(a, _shift_for_offset(off, p_lanes), axis=1)

    for li, L in enumerate(layers):
        w_ref = w_refs[li]
        src = vals[L.src]
        if L.path == "merge":
            # One MXU matmul; contraction over (tap, cin); single bf16 cast.
            rhs = jnp.concatenate([shifted(src, o) for o in L.offsets], axis=0)
            y = jnp.dot(w_ref[...], rhs.astype(jnp.bfloat16),
                        preferred_element_type=jnp.float32)
        elif L.path == "taps":
            src_b = src.astype(jnp.bfloat16)           # cast once per layer
            y = None
            for t, off in enumerate(L.offsets):
                c = jnp.dot(w_ref[t], shifted(src_b, off),
                            preferred_element_type=jnp.float32)
                y = c if y is None else y + c
        else:                                          # "vpu": cin == 1, f32
            y = None
            for t, off in enumerate(L.offsets):
                c = w_ref[t] * shifted(src, off)       # (cout,1)*(1,P)
                y = c if y is None else y + c
        if L.scale_off >= 0:
            y = y * aff(L.scale_off, L.cout)
        if L.shift_off >= 0:
            y = y + aff(L.shift_off, L.cout)
        if L.act == "relu":
            y = jnp.maximum(y, 0.0)
        elif L.act == "sigmoid":
            y = jax.nn.sigmoid(y)
        if L.residual_src is not None:
            y = y * mask + vals[L.residual_src]        # zero-halo branch + skip
        if L.ps_off >= 0:
            y = y * aff(L.ps_off, L.cout) + aff(L.psh_off, L.cout)
        if L.mask:
            y = y * mask                               # keep halo exactly zero
        vals.append(y)
    out_ref[...] = vals[-1].astype(out_ref.dtype)


# ---------------------------------------------------------------------------
# Stage builder (host-side, tiny)
# ---------------------------------------------------------------------------
class _StageBuilder:
    """Collects layers, packed weights and the packed affine vector of a stage."""

    def __init__(self):
        self.layers = []
        self.weights = []
        self._aff = []
        self._aff_len = 0

    def _add_aff(self, v, rows):
        if v is None:
            return -1
        v = jnp.asarray(v, jnp.float32).reshape(-1)
        assert v.shape[0] == rows
        off = self._aff_len
        self._aff.append(v)
        self._aff_len += rows
        return off

    def add_layer(self, src, offsets, taps, *, scale=None, shift=None,
                  act="none", residual_src=None, post_scale=None,
                  post_shift=None, mask=False):
        k, rows, cin = taps.shape
        assert len(offsets) == k
        if cin == 1:
            path, w = "vpu", taps.astype(jnp.float32)
        elif cin % 8 == 0:
            path = "merge"                 # single matmul, tile-aligned concat
            w = (jnp.transpose(taps, (1, 0, 2))
                 .reshape(rows, k * cin).astype(jnp.bfloat16))
        else:
            path, w = "taps", taps.astype(jnp.bfloat16)
        self.weights.append(w)
        self.layers.append(LayerSpec(
            src=src, offsets=tuple(int(o) for o in offsets), cout=rows,
            path=path, act=act, residual_src=residual_src, mask=mask,
            scale_off=self._add_aff(scale, rows),
            shift_off=self._add_aff(shift, rows),
            ps_off=self._add_aff(post_scale, rows),
            psh_off=self._add_aff(post_shift, rows)))
        return len(self.layers)            # index of this output in `vals`

    def affine_pack(self):
        if not self._aff:
            return jnp.zeros((8, 1), jnp.float32)
        return jnp.concatenate(self._aff, axis=0).reshape(-1, 1)


_LANE_TARGET = 1024    # per-grid-step lane budget (bounds VMEM, splits batch)


def _imgs_per_block(n, img_lanes):
    nb = max(1, min(n, _LANE_TARGET // max(img_lanes, 1)))
    while n % nb:
        nb -= 1
    return nb


def _run_stage(x, builder, *, mask, n_imgs, img_lanes, out_dtype):
    layers = tuple(builder.layers)
    if mask is None:
        assert all(l.residual_src is None and not l.mask for l in layers)
    weights = builder.weights
    aff = builder.affine_pack()
    out_ch = layers[-1].cout
    nb = _imgs_per_block(n_imgs, img_lanes)
    blk = nb * img_lanes
    grid = (n_imgs // nb,)

    args = [x]
    in_specs = [pl.BlockSpec((x.shape[0], blk), lambda i: (0, i))]
    if mask is not None:
        args.append(mask)
        in_specs.append(pl.BlockSpec((1, blk), lambda i: (0, i)))
    args.append(aff)
    in_specs.append(pl.BlockSpec(aff.shape, lambda i: (0, 0)))
    for w in weights:
        args.append(w)
        in_specs.append(pl.BlockSpec(w.shape, lambda i, _nd=w.ndim: (0,) * _nd))

    kernel = functools.partial(_stage_kernel, layers=layers,
                               has_mask=mask is not None)
    return pl.pallas_call(
        kernel,
        out_shape=jax.ShapeDtypeStruct((out_ch, n_imgs * img_lanes), out_dtype),
        grid=grid,
        in_specs=in_specs,
        out_specs=pl.BlockSpec((out_ch, blk), lambda i: (0, i)),
        compiler_params=pltpu.CompilerParams(
            dimension_semantics=("parallel",),
            vmem_limit_bytes=32 * 1024 * 1024),
    )(*args)


# ---------------------------------------------------------------------------
# Layer / parameter preparation (plain-JAX, tiny)
# ---------------------------------------------------------------------------
def _conv_taps(w_oihw):
    """Conv2d weight (Cout,Cin,kh,kw) -> (K, Cout, Cin), K in (di,dj) order."""
    co, ci, kh, kw = w_oihw.shape
    return jnp.transpose(w_oihw, (2, 3, 0, 1)).reshape(kh * kw, co, ci)


def _convT_subpixel_taps(w_iohw):
    """ConvTranspose2d weight (Cin,Cout,4,4) -> sub-pixel taps (4, 4*Cout, Cin).

    Output row (a*2+b)*Cout + co is parity plane (a,b) of output channel co;
    tap t = dp*2 + dq reads the compact-grid input at offset (-dp, -dq),
    i.e. flat offsets (0, -1, -wp, -wp-1).
    """
    ci, co = w_iohw.shape[:2]
    w = jnp.transpose(w_iohw, (2, 3, 1, 0))            # [p, q, co, ci]
    w = w.reshape(2, 2, 2, 2, co, ci)                  # [dp, a, dq, b, co, ci]
    w = jnp.transpose(w, (0, 2, 1, 3, 4, 5))           # [dp, dq, a, b, co, ci]
    return w.reshape(4, 4 * co, ci)


def _offsets3(wp):
    return tuple((di - 1) * wp + (dj - 1) for di in range(3) for dj in range(3))


def _offsets4(wp):
    return tuple(di * wp + dj for di in range(4) for dj in range(4))


def _offsets_ct(wp):
    return (0, -1, -wp, -(wp + 1))


def _bn_fold(bn, eps=1e-5):
    s = bn["gamma"] / jnp.sqrt(bn["var"] + eps)
    return s, bn["beta"] - bn["mean"] * s


def _add_basic_block(b, bp, src, off3, post_bn=None, mask_out=False):
    """BasicBlock: conv3x3->BN->ReLU->conv3x3->BN ; out = x + branch (+postBN)."""
    s1, t1 = _bn_fold(bp["bn1"])
    s2, t2 = _bn_fold(bp["bn2"])
    ps = ph = None
    if post_bn is not None:
        ps, ph = _bn_fold(post_bn)
    v1 = b.add_layer(src, off3, _conv_taps(bp["conv1"]["w"]),
                     scale=s1, shift=t1, act="relu", mask=True)
    return b.add_layer(v1, off3, _conv_taps(bp["conv2"]["w"]),
                       scale=s2, shift=t2, residual_src=src,
                       post_scale=ps, post_shift=ph, mask=mask_out)


# ---------------------------------------------------------------------------
# Flat-layout glue (tiny XLA ops at spatial-resolution changes)
# ---------------------------------------------------------------------------
def _flatten_imgs(x_cnhw, lo, hi):
    """(C,N,H,W) -> zero-halo'd, per-image lane-padded (C, N*L) flat layout."""
    c, n = x_cnhw.shape[:2]
    xp = jnp.pad(x_cnhw, ((0, 0), (0, 0), (lo, hi), (lo, hi)))
    hp, wp = xp.shape[2], xp.shape[3]
    L = _round_up(hp * wp, 128)
    flat = xp.reshape(c, n, hp * wp)
    if L != hp * wp:
        flat = jnp.pad(flat, ((0, 0), (0, 0), (0, L - hp * wp)))
    return flat.reshape(c, n * L), hp, wp, L


def _unflatten_imgs(y, n, hp, wp, L):
    c = y.shape[0]
    return y.reshape(c, n, L)[:, :, :hp * wp].reshape(c, n, hp, wp)


def _mask_flat(n, h, w, lo, hi):
    ones = jnp.ones((1, n, h, w), jnp.float32)
    return _flatten_imgs(ones, lo, hi)[0]


def _interleave_ct(y, n, hp, wp, L, cout, h_in, w_in, op):
    """Interleave the 4 sub-pixel parity planes of a ConvTranspose output."""
    mh, mw = h_in + 2, w_in + 2
    y4 = _unflatten_imgs(y, n, hp, wp, L)[:, :, 1:1 + mh, 1:1 + mw]
    y4 = y4.reshape(2, 2, cout, n, mh, mw)              # [a, b, co, n, m, k]
    full = jnp.transpose(y4, (2, 3, 4, 0, 5, 1))        # [co, n, m, a, k, b]
    full = full.reshape(cout, n, 2 * mh, 2 * mw)
    return full[:, :, :2 * h_in + 2 + op, :2 * w_in + 2 + op]


# ---------------------------------------------------------------------------
# Encoder / Decoder / Autoencoder forward
# ---------------------------------------------------------------------------
def _encoder(x_img, n, h, w, p):
    # --- E1: conv0+BN0 -> BasicBlock0 -> conv1(4x4,s2)+bias+BN1 (dense) ---
    x, hp, wp, L = _flatten_imgs(x_img, 1, 1)
    mask = _mask_flat(n, h, w, 1, 1)
    b = _StageBuilder()
    off3, off4 = _offsets3(wp), _offsets4(wp)
    s0, t0 = _bn_fold(p["bn0"])
    v = b.add_layer(0, off3, _conv_taps(p["conv0"]["w"]),
                    scale=s0, shift=s0 * p["conv0"]["b"] + t0, mask=True)
    v = _add_basic_block(b, p["bb0"], v, off3)
    s1, t1 = _bn_fold(p["bn1"])
    b.add_layer(v, off4, _conv_taps(p["conv1"]["w"]),
                scale=s1, shift=s1 * p["conv1"]["b"] + t1)
    y = _run_stage(x, b, mask=mask, n_imgs=n, img_lanes=L,
                   out_dtype=jnp.bfloat16)
    ho, wo = (h - 4) // 2 + 1, (w - 4) // 2 + 1
    cur = _unflatten_imgs(y, n, hp, wp, L)[:, :, 1:1 + 2 * ho:2, 1:1 + 2 * wo:2]
    h, w = ho, wo

    # --- E2: BasicBlock1 -> conv2(4x4,s2)+bias+BN2 (dense) ---
    x, hp, wp, L = _flatten_imgs(cur, 1, 1)
    mask = _mask_flat(n, h, w, 1, 1)
    b = _StageBuilder()
    off3, off4 = _offsets3(wp), _offsets4(wp)
    v = _add_basic_block(b, p["bb1"], 0, off3)
    s2, t2 = _bn_fold(p["bn2"])
    b.add_layer(v, off4, _conv_taps(p["conv2"]["w"]),
                scale=s2, shift=s2 * p["conv2"]["b"] + t2)
    y = _run_stage(x, b, mask=mask, n_imgs=n, img_lanes=L,
                   out_dtype=jnp.bfloat16)
    ho, wo = (h - 4) // 2 + 1, (w - 4) // 2 + 1
    cur = _unflatten_imgs(y, n, hp, wp, L)[:, :, 1:1 + 2 * ho:2, 1:1 + 2 * wo:2]
    h, w = ho, wo

    # --- E3: BasicBlock2 -> conv3(4x4,s2, no bias/BN) (dense) ---
    x, hp, wp, L = _flatten_imgs(cur, 1, 1)
    mask = _mask_flat(n, h, w, 1, 1)
    b = _StageBuilder()
    off3, off4 = _offsets3(wp), _offsets4(wp)
    v = _add_basic_block(b, p["bb2"], 0, off3)
    b.add_layer(v, off4, _conv_taps(p["conv3"]["w"]))
    y = _run_stage(x, b, mask=mask, n_imgs=n, img_lanes=L,
                   out_dtype=jnp.bfloat16)
    ho, wo = (h - 4) // 2 + 1, (w - 4) // 2 + 1
    lat = _unflatten_imgs(y, n, hp, wp, L)[:, :, 1:1 + 2 * ho:2, 1:1 + 2 * wo:2]
    return lat                                        # (f3, N, ho, wo) bf16


def _decoder(lat, n, p):
    h, w = lat.shape[2], lat.shape[3]

    # --- D1: ConvTranspose0 + bias (sub-pixel, one matmul) ---
    f2 = p["ct0"]["w"].shape[1]
    x, hp, wp, L = _flatten_imgs(lat, 1, 2)
    b = _StageBuilder()
    b.add_layer(0, _offsets_ct(wp), _convT_subpixel_taps(p["ct0"]["w"]),
                shift=jnp.tile(p["ct0"]["b"], 4))
    y = _run_stage(x, b, mask=None, n_imgs=n, img_lanes=L,
                   out_dtype=jnp.bfloat16)
    cur = _interleave_ct(y, n, hp, wp, L, f2, h, w, op=1)
    h, w = 2 * h + 3, 2 * w + 3

    # --- D2 (BasicBlock + BN0) fused with D3 (ConvTranspose1 + bias) ---
    f1 = p["ct1"]["w"].shape[1]
    x, hp, wp, L = _flatten_imgs(cur, 1, 2)
    mask = _mask_flat(n, h, w, 1, 2)
    b = _StageBuilder()
    v = _add_basic_block(b, p["bb0"], 0, _offsets3(wp),
                         post_bn=p["bn0"], mask_out=True)
    b.add_layer(v, _offsets_ct(wp), _convT_subpixel_taps(p["ct1"]["w"]),
                shift=jnp.tile(p["ct1"]["b"], 4))
    y = _run_stage(x, b, mask=mask, n_imgs=n, img_lanes=L,
                   out_dtype=jnp.bfloat16)
    cur = _interleave_ct(y, n, hp, wp, L, f1, h, w, op=1)
    h, w = 2 * h + 3, 2 * w + 3

    # --- D4 (BasicBlock + BN1) fused with D5 (ConvTranspose2 + bias, op=0) ---
    f0 = p["ct2"]["w"].shape[1]
    x, hp, wp, L = _flatten_imgs(cur, 1, 2)
    mask = _mask_flat(n, h, w, 1, 2)
    b = _StageBuilder()
    v = _add_basic_block(b, p["bb1"], 0, _offsets3(wp),
                         post_bn=p["bn1"], mask_out=True)
    b.add_layer(v, _offsets_ct(wp), _convT_subpixel_taps(p["ct2"]["w"]),
                shift=jnp.tile(p["ct2"]["b"], 4))
    y = _run_stage(x, b, mask=mask, n_imgs=n, img_lanes=L,
                   out_dtype=jnp.bfloat16)
    cur = _interleave_ct(y, n, hp, wp, L, f0, h, w, op=0)
    h, w = 2 * h + 2, 2 * w + 2

    # --- D6: BasicBlock + BN2 + final conv3x3 + bias + sigmoid ---
    x, hp, wp, L = _flatten_imgs(cur, 1, 1)
    mask = _mask_flat(n, h, w, 1, 1)
    b = _StageBuilder()
    off3 = _offsets3(wp)
    v = _add_basic_block(b, p["bb2"], 0, off3, post_bn=p["bn2"], mask_out=True)
    b.add_layer(v, off3, _conv_taps(p["convf"]["w"]),
                shift=p["convf"]["b"], act="sigmoid")
    y = _run_stage(x, b, mask=mask, n_imgs=n, img_lanes=L,
                   out_dtype=jnp.float32)
    out = _unflatten_imgs(y, n, hp, wp, L)[:, :, 1:1 + h, 1:1 + w]
    return out                                        # (1, N, H, W) f32


@jax.jit
def _forward(x_nchw, params):
    n, _, h, w = x_nchw.shape
    x = jnp.transpose(x_nchw.astype(jnp.float32), (1, 0, 2, 3))  # (C=1,N,H,W)
    lat = _encoder(x, n, h, w, params["encoder"])
    out = _decoder(lat, n, params["decoder"])
    return jnp.transpose(out, (1, 0, 2, 3))                       # NCHW f32


def autoencoder_forward(x_nchw, params):
    _ensure_roll_convention()      # resolved outside the jit trace, cached
    return _forward(x_nchw, params)


# ---------------------------------------------------------------------------
# Deterministic parameter init (shapes follow the PyTorch module __init__)
# ---------------------------------------------------------------------------
def _init_conv(key, cout, cin, k, bias=True):
    kw, kb = jax.random.split(key)
    p = {"w": 0.1 * jax.random.normal(kw, (cout, cin, k, k), jnp.float32)}
    if bias:
        p["b"] = 0.05 * jax.random.normal(kb, (cout,), jnp.float32)
    return p


def _init_convT(key, cin, cout, k):
    kw, kb = jax.random.split(key)
    return {"w": 0.1 * jax.random.normal(kw, (cin, cout, k, k), jnp.float32),
            "b": 0.05 * jax.random.normal(kb, (cout,), jnp.float32)}


def _init_bn(key, c):
    k1, k2, k3, k4 = jax.random.split(key, 4)
    return {"gamma": 1.0 + 0.1 * jax.random.normal(k1, (c,), jnp.float32),
            "beta": 0.1 * jax.random.normal(k2, (c,), jnp.float32),
            "mean": 0.1 * jax.random.normal(k3, (c,), jnp.float32),
            "var": 1.0 + 0.1 * jnp.abs(jax.random.normal(k4, (c,), jnp.float32))}


def _init_basic_block(key, c):
    k1, k2, k3, k4 = jax.random.split(key, 4)
    return {"conv1": _init_conv(k1, c, c, 3, bias=False),
            "bn1": _init_bn(k2, c),
            "conv2": _init_conv(k3, c, c, 3, bias=False),
            "bn2": _init_bn(k4, c)}


def init_autoencoder_params(key, filters):
    f0, f1, f2, f3 = filters
    ks = jax.random.split(key, 20)
    encoder = {
        "conv0": _init_conv(ks[0], f0, 1, 3),
        "bn0": _init_bn(ks[1], f0),
        "bb0": _init_basic_block(ks[2], f0),
        "conv1": _init_conv(ks[3], f1, f0, 4),
        "bn1": _init_bn(ks[4], f1),
        "bb1": _init_basic_block(ks[5], f1),
        "conv2": _init_conv(ks[6], f2, f1, 4),
        "bn2": _init_bn(ks[7], f2),
        "bb2": _init_basic_block(ks[8], f2),
        "conv3": _init_conv(ks[9], f3, f2, 4, bias=False),
    }
    decoder = {
        "ct0": _init_convT(ks[10], f3, f2, 4),
        "bb0": _init_basic_block(ks[11], f2),
        "bn0": _init_bn(ks[12], f2),
        "ct1": _init_convT(ks[13], f2, f1, 4),
        "bb1": _init_basic_block(ks[14], f1),
        "bn1": _init_bn(ks[15], f1),
        "ct2": _init_convT(ks[16], f1, f0, 4),
        "bb2": _init_basic_block(ks[17], f0),
        "bn2": _init_bn(ks[18], f0),
        "convf": _init_conv(ks[19], 1, f0, 3),
    }
    return {"encoder": encoder, "decoder": decoder}


if __name__ == "__main__":
    _ensure_roll_convention()

    key = jax.random.PRNGKey(0)
    pkey, xkey = jax.random.split(key)
    filters = (4, 8, 16, 32)
    params = init_autoencoder_params(pkey, filters)

    # MNIST-like input: batch=2, 1 channel, 28x28 (spatial 28->13->5->1->5->13->28)
    x = jax.random.normal(xkey, (2, 1, 28, 28), jnp.float32)

    y = autoencoder_forward(x, params)
    jax.block_until_ready(y)

    assert y.shape == (2, 1, 28, 28), y.shape
    assert bool(jnp.all(jnp.isfinite(y)))
    assert bool(jnp.all((y >= 0.0) & (y <= 1.0)))   # sigmoid output
    print("KERNEL_OK")
</pallas_src>

<mosaic_0001>
module attributes {stable_mosaic.version = 11 : i64} {
  func.func @k(%arg0: i32, %arg1: memref<8x128xf32, #tpu.memory_space<vmem>>, %arg2: memref<8x128xf32, #tpu.memory_space<vmem>>) attributes {dimension_semantics = [#tpu.dimension_semantics<arbitrary>], iteration_bounds = array<i64: 1>, scalar_prefetch = 0 : i64, scratch_operands = 0 : i64, tpu.core_type = #tpu.core_type<tc>, window_params = [{pipeline_mode = #tpu.pipeline_mode<synchronous>, transform_indices = @transform_0, window_bounds = array<i64: 8, 128>}, {pipeline_mode = #tpu.pipeline_mode<synchronous>, transform_indices = @transform_1, window_bounds = array<i64: 8, 128>}]} {
    %c0 = arith.constant 0 : index
    %c0_0 = arith.constant 0 : index
    %0 = vector.load %arg1[%c0, %c0_0] : memref<8x128xf32, #tpu.memory_space<vmem>>, vector<8x128xf32>
    %c1_i32 = arith.constant 1 : i32
    %1 = tpu.dynamic_rotate %0 by %c1_i32 dim 1 : vector<8x128xf32>, i32 -> vector<8x128xf32>
    %c0_1 = arith.constant 0 : index
    %c0_2 = arith.constant 0 : index
    %2 = vector.load %arg2[%c0_1, %c0_2] : memref<8x128xf32, #tpu.memory_space<vmem>>, vector<8x128xf32>
    tpu.vector_store %arg2[%c0_1, %c0_2], %1 {strides = array<i32>} : memref<8x128xf32, #tpu.memory_space<vmem>>, vector<8x128xf32>,
    return
  }
  func.func @transform_0(%arg0: i32) -> (i32, i32) {
    %c0_i32 = arith.constant 0 : i32
    %c0_i32_0 = arith.constant 0 : i32
    %c0_i32_1 = arith.constant 0 : i32
    return %c0_i32, %c0_i32_0 : i32, i32
  }
  func.func @transform_1(%arg0: i32) -> (i32, i32) {
    %c0_i32 = arith.constant 0 : i32
    %c0_i32_0 = arith.constant 0 : i32
    %c0_i32_1 = arith.constant 0 : i32
    return %c0_i32, %c0_i32_0 : i32, i32
  }
}

</mosaic_0001>

<llo_original>
// kernel: tpu_custom_call.1
$region0: #{tpu_custom_call.1}
  #allocation0 [shape = 'u32[]', space=smem, size = 0x4, offset = 0x4, fixed_abs, tag = 'smem constant byte address 0x4 - core index']
  #allocation1 [shape = 'u32[144,128]{1,0:T(1,128)}', space=vmem, size = 0x12000, scoped, tag = 'internal scratch']
  %s0 = inlined_call_operand.hbm [shape: f32[8,128], index: 0, kind: input, shape index: {}]
  %s1 = inlined_call_operand.hbm [shape: f32[8,128], index: 1, kind: output, shape index: {}]
  %s2 = sld [smem:[#allocation0]]
  $region18: #{tpu_custom_call.1} parent=0
    _
  %s4 = ssub.s32 1, %s2
  %s5 = scalar_select 0, %s4, %s2
  $region1: #{tpu_custom_call.1} parent=0
    #allocation2 [shape = 'u8[4096]{0}', space=vmem, size = 0x1000, scoped, tag = 'input window, operand 0, single buffered']
    #allocation3 [shape = 's32[1]{0}', space=sflag, size = 0x4, scoped, tag = 'scoped memory for tpu_custom_call.1']
    #allocation4 [shape = 's32[1]{0}', space=sflag, size = 0x4, scoped, tag = 'scoped memory for tpu_custom_call.1']
    #allocation5 [shape = 'u8[4096]{0}', space=vmem, size = 0x1000, scoped, tag = 'output window, operand 0, single buffered']
    %6 = vsyncpa [#allocation3], 0
    %7 = vsyncpa [#allocation4], 0
    // Predicated region
    $region2: #{tpu_custom_call.1} parent=1 // pred_check
      _
    $region3: #{tpu_custom_call.1} parent=1 // pred_check_branch
      %9 = sbr.rel (0) target = $region5
    $region4: #{tpu_custom_call.1} parent=1 // pred_region
      %s11 = ssub.s32 128, 128
      %12 = vsyncadd [#allocation3], %s11
      %s14 = sshll.u32 [#allocation2], 4
      %s15 = int_to_ptr.vmem [resolvable:$true] %s14
      %17 = dma.hbm_to_vmem [thread:$0]  %s0, 128, %s15, [#allocation3]
    $region5: #{tpu_custom_call.1} parent=1 // pred_fallthru
      _
    // Predicated region
    $region6: #{tpu_custom_call.1} parent=1 // pred_check
      _
    $region7: #{tpu_custom_call.1} parent=1 // pred_check_branch
      %19 = sbr.rel (0) target = $region9
    $region8: #{tpu_custom_call.1} parent=1 // pred_region
      %20 = dma.done [#allocation3], 128
    $region9: #{tpu_custom_call.1} parent=1 // pred_fallthru
      _
    %v21 = vld [vmem:[#allocation2] sm:$0xff]
    %22 = vrot.lane.b32.xlu0 %v21, 1
    %v23 = vpop.permute.xlu0 %22
    %24 = vst [vmem:[#allocation5] sm:$0xff] %v23
    // Predicated region
    $region10: #{tpu_custom_call.1} parent=1 // pred_check
      _
    $region11: #{tpu_custom_call.1} parent=1 // pred_check_branch
      %26 = sbr.rel (0) target = $region13
    $region12: #{tpu_custom_call.1} parent=1 // pred_region
      %s28 = ssub.s32 128, 128
      %29 = vsyncadd [#allocation4], %s28
      %s31 = sshll.u32 [#allocation5], 4
      %s32 = int_to_ptr.vmem [resolvable:$true] %s31
      %34 = dma.vmem_to_hbm [thread:$0]  %s32, 128, %s1, [#allocation4]
    $region13: #{tpu_custom_call.1} parent=1 // pred_fallthru
      _
    // Predicated region
    $region14: #{tpu_custom_call.1} parent=1 // pred_check
      _
    $region15: #{tpu_custom_call.1} parent=1 // pred_check_branch
      %36 = sbr.rel (0) target = $region17
    $region16: #{tpu_custom_call.1} parent=1 // pred_region
      %37 = dma.done [#allocation4], 128
    $region17: #{tpu_custom_call.1} parent=1 // pred_fallthru
      _
    %38 = vsyncpa [#allocation3], 1
    %39 = vsyncpa [#allocation4], 1

</llo_original>
